<compile_context>
chip_gen: v7x
topology: tpu7x:2x2x1
jax: 0.10.0
libtpu: 0.0.40
codegen_flags: <defaults>
</compile_context>

<pallas_src>
import functools

import jax
import jax.numpy as jnp
from jax.experimental import pallas as pl
from jax.experimental.pallas import tpu as pltpu


def _basic_block_kernel(x_ref, w1_ref, s1_ref, b1_ref, w2_ref, s2_ref, b2_ref,
                        o_ref, *, H, W):
    # x_ref : (1, C,   H*W)      one image, flattened NCHW (lane-dense)
    # w*_ref: (Cout, 9*Cin)      conv taps packed into the contraction dim
    # s*/b* : (Cout, 1)          folded BN scale / bias (f32)
    # o_ref : (1, Cout, H*W)     flattened NCHW output (lane-dense store)
    C = x_ref.shape[1]
    Cout = o_ref.shape[1]
    S = H * W                      # flattened spatial size
    P = S + 2 * W                  # spatial size + one zero image row per side
    mm_dtype = w1_ref.dtype

    # Column index along the padded spatial axis -> position within an image row.
    lane = jax.lax.broadcasted_iota(jnp.int32, (1, P), 1)
    w_pos = lane % W
    border = {0: w_pos != 0, 2: w_pos != (W - 1)}        # masks for dx = 0 / 2
    halo = jnp.logical_or(lane < W, lane >= W + S)       # the two zero pad rows

    def conv3x3(a, w_ref):
        # a: (Cin, P) f32, zero on its halo columns.  Widen the halo to 3 rows
        # so every 3x3 tap window becomes a contiguous lane-slice.
        Cin = a.shape[0]
        z = jnp.zeros((Cin, 2 * W), jnp.float32)
        wide = jnp.concatenate([z, a, z], axis=1)        # (Cin, P + 4W)
        taps = []
        for dy in range(3):
            for dx in range(3):
                start = (dy + 1) * W + (dx - 1)          # static window offset
                t = wide[:, start:start + P]             # (Cin, P) lane slice
                if dx in border:                         # zero the taps reading
                    t = jnp.where(border[dx], t, 0.0)    # across the W border
                taps.append(t)
        # im2col with the 9 taps packed into the contraction dim: K = 9*Cin.
        im2col = jnp.concatenate(taps, axis=0).astype(mm_dtype)   # (9*Cin, P)
        return jax.lax.dot_general(                      # (Cout, P), f32 accum
            w_ref[...], im2col,
            dimension_numbers=(((1,), (0,)), ((), ())),
            preferred_element_type=jnp.float32)

    # ---- load x once (identity branch reuses this value; no second DMA) ----
    x = x_ref[0].astype(jnp.float32)                     # (C, S)
    zrow = jnp.zeros((C, W), jnp.float32)
    x_pad = jnp.concatenate([zrow, x, zrow], axis=1)     # (C, P)

    # ---- conv1 -> bn1 -> relu ----
    y1 = conv3x3(x_pad, w1_ref)
    y1 = jnp.maximum(y1 * s1_ref[...] + b1_ref[...], 0.0)
    y1 = jnp.where(halo, 0.0, y1)        # restore exact zeros in the pad rows

    # ---- conv2 -> bn2 -> + identity -> relu ----
    y2 = conv3x3(y1, w2_ref)
    y2 = y2 * s2_ref[...] + b2_ref[...]
    out = jnp.maximum(y2[:, W:W + S] + x, 0.0)           # (Cout, S) f32

    o_ref[0] = out.astype(o_ref.dtype)   # unmasked, lane-dense store


def basic_block_pallas(x_nchw, w1_oihw, g1, be1, m1, v1,
                       w2_oihw, g2, be2, m2, v2,
                       eps=1e-5, matmul_dtype=jnp.float32):
    """Fused BasicBlock forward.  Input/output are NCHW (PyTorch convention)."""
    N, C, H, W = x_nchw.shape
    Cout = w1_oihw.shape[0]
    assert Cout == C, "BasicBlock with downsample=None requires planes == inplanes"
    S = H * W

    # Flattened NCHW: (N, C, H*W).  Free reshape; the trailing (lane) dim is
    # H*W, which is lane-dense for typical ResNet spatial sizes.
    x = x_nchw.reshape(N, C, S).astype(matmul_dtype)

    # OIHW -> (Cout, kh*kw*Cin), tap-major to match the kernel's im2col order.
    w1 = jnp.transpose(w1_oihw, (0, 2, 3, 1)).reshape(Cout, 9 * C).astype(matmul_dtype)
    w2 = jnp.transpose(w2_oihw, (0, 2, 3, 1)).reshape(Cout, 9 * Cout).astype(matmul_dtype)

    # Fold BatchNorm (inference form) into per-channel scale / bias (f32).
    inv1 = 1.0 / jnp.sqrt(v1 + eps)
    inv2 = 1.0 / jnp.sqrt(v2 + eps)
    s1 = (g1 * inv1).reshape(Cout, 1).astype(jnp.float32)
    b1 = (be1 - m1 * g1 * inv1).reshape(Cout, 1).astype(jnp.float32)
    s2 = (g2 * inv2).reshape(Cout, 1).astype(jnp.float32)
    b2 = (be2 - m2 * g2 * inv2).reshape(Cout, 1).astype(jnp.float32)

    kernel = functools.partial(_basic_block_kernel, H=H, W=W)

    out = pl.pallas_call(
        kernel,
        out_shape=jax.ShapeDtypeStruct((N, Cout, S), jnp.float32),
        grid_spec=pltpu.PrefetchScalarGridSpec(
            num_scalar_prefetch=0,
            grid=(N,),
            in_specs=[
                pl.BlockSpec((1, C, S), lambda n: (n, 0, 0)),
                pl.BlockSpec((Cout, 9 * C), lambda n: (0, 0)),
                pl.BlockSpec((Cout, 1), lambda n: (0, 0)),
                pl.BlockSpec((Cout, 1), lambda n: (0, 0)),
                pl.BlockSpec((Cout, 9 * Cout), lambda n: (0, 0)),
                pl.BlockSpec((Cout, 1), lambda n: (0, 0)),
                pl.BlockSpec((Cout, 1), lambda n: (0, 0)),
            ],
            out_specs=pl.BlockSpec((1, Cout, S), lambda n: (n, 0, 0)),
        ),
        compiler_params=pltpu.CompilerParams(
            dimension_semantics=("parallel",),       # shard batch across cores
            vmem_limit_bytes=32 * 1024 * 1024,
        ),
    )(x, w1, s1, b1, w2, s2, b2)

    # (N, C, H*W) is already NCHW element order - just un-flatten the spatial dims.
    return out.reshape(N, Cout, H, W)


def basic_block_ref(x, w1, g1, be1, m1, v1, w2, g2, be2, m2, v2, eps=1e-5):
    """Pure-JAX reference (NCHW), mirroring the PyTorch module in eval mode."""
    def conv(a, w):
        return jax.lax.conv_general_dilated(
            a, w, window_strides=(1, 1), padding=((1, 1), (1, 1)),
            dimension_numbers=("NCHW", "OIHW", "NCHW"))

    def bn(a, g, b, m, v):
        g, b, m, v = (t[None, :, None, None] for t in (g, b, m, v))
        return (a - m) / jnp.sqrt(v + eps) * g + b

    out = jnp.maximum(bn(conv(x, w1), g1, be1, m1, v1), 0.0)
    out = bn(conv(out, w2), g2, be2, m2, v2)
    return jnp.maximum(out + x, 0.0)


if __name__ == "__main__":
    key = jax.random.PRNGKey(0)
    N, C, H, W = 2, 8, 16, 16  # inplanes = planes = 8

    ks = jax.random.split(key, 11)
    x = jax.random.normal(ks[0], (N, C, H, W), jnp.float32)
    w1 = jax.random.normal(ks[1], (C, C, 3, 3), jnp.float32) * 0.1
    w2 = jax.random.normal(ks[2], (C, C, 3, 3), jnp.float32) * 0.1
    g1 = 1.0 + 0.1 * jax.random.normal(ks[3], (C,), jnp.float32)
    be1 = 0.1 * jax.random.normal(ks[4], (C,), jnp.float32)
    m1 = 0.1 * jax.random.normal(ks[5], (C,), jnp.float32)
    v1 = 0.5 + jax.random.uniform(ks[6], (C,), jnp.float32)
    g2 = 1.0 + 0.1 * jax.random.normal(ks[7], (C,), jnp.float32)
    be2 = 0.1 * jax.random.normal(ks[8], (C,), jnp.float32)
    m2 = 0.1 * jax.random.normal(ks[9], (C,), jnp.float32)
    v2 = 0.5 + jax.random.uniform(ks[10], (C,), jnp.float32)

    args = (x, w1, g1, be1, m1, v1, w2, g2, be2, m2, v2)
    ref = basic_block_ref(*args)

    # Exact-precision run (f32 matmuls): module semantics, tight tolerance.
    out = jax.block_until_ready(basic_block_pallas(*args, matmul_dtype=jnp.float32))
    assert out.shape == (N, C, H, W)
    assert jnp.allclose(out, ref, rtol=1e-3, atol=1e-3), "f32 kernel mismatch vs reference"

    # bf16-matmul fast path (v6e/v7x MXU): f32 accumulation + f32 elementwise.
    out_bf16 = jax.block_until_ready(basic_block_pallas(*args, matmul_dtype=jnp.bfloat16))
    assert jnp.allclose(out_bf16, ref, rtol=5e-2, atol=5e-2), "bf16 kernel mismatch vs reference"

    print("KERNEL_OK")
</pallas_src>

<mosaic_0001>
module attributes {stable_mosaic.version = 11 : i64} {
  func.func @_basic_block_kernel(%arg0: i32, %arg1: memref<1x8x256xf32, #tpu.memory_space<vmem>>, %arg2: memref<8x72xf32, #tpu.memory_space<vmem>>, %arg3: memref<8x1xf32, #tpu.memory_space<vmem>>, %arg4: memref<8x1xf32, #tpu.memory_space<vmem>>, %arg5: memref<8x72xf32, #tpu.memory_space<vmem>>, %arg6: memref<8x1xf32, #tpu.memory_space<vmem>>, %arg7: memref<8x1xf32, #tpu.memory_space<vmem>>, %arg8: memref<1x8x256xf32, #tpu.memory_space<vmem>>) attributes {dimension_semantics = [#tpu.dimension_semantics<parallel>], iteration_bounds = array<i64: 2>, scalar_prefetch = 0 : i64, scratch_operands = 0 : i64, tpu.core_type = #tpu.core_type<tc>, window_params = [{transform_indices = @transform_0, window_bounds = array<i64: 1, 8, 256>}, {pipeline_mode = #tpu.pipeline_mode<synchronous>, transform_indices = @transform_1, window_bounds = array<i64: 8, 72>}, {pipeline_mode = #tpu.pipeline_mode<synchronous>, transform_indices = @transform_2, window_bounds = array<i64: 8, 1>}, {pipeline_mode = #tpu.pipeline_mode<synchronous>, transform_indices = @transform_3, window_bounds = array<i64: 8, 1>}, {pipeline_mode = #tpu.pipeline_mode<synchronous>, transform_indices = @transform_4, window_bounds = array<i64: 8, 72>}, {pipeline_mode = #tpu.pipeline_mode<synchronous>, transform_indices = @transform_5, window_bounds = array<i64: 8, 1>}, {pipeline_mode = #tpu.pipeline_mode<synchronous>, transform_indices = @transform_6, window_bounds = array<i64: 8, 1>}, {transform_indices = @transform_7, window_bounds = array<i64: 1, 8, 256>}]} {
    %0 = tpu.iota {dimensions = array<i32: 1>} : vector<1x288xi32>
    %c16_i32 = arith.constant 16 : i32
    %c0_i32 = arith.constant 0 : i32
    %1 = arith.cmpi eq, %c16_i32, %c0_i32 : i32
    %c1_i32 = arith.constant 1 : i32
    %2 = arith.select %1, %c1_i32, %c16_i32 : i32
    %3 = vector.broadcast %2 : i32 to vector<1x288xi32>
    %4 = arith.remsi %0, %3 : vector<1x288xi32>
    %c0_i32_0 = arith.constant 0 : i32
    %5 = vector.broadcast %c0_i32_0 : i32 to vector<1x288xi32>
    %6 = arith.cmpi ne, %4, %5 : vector<1x288xi32>
    %c0_i32_1 = arith.constant 0 : i32
    %7 = vector.broadcast %c0_i32_1 : i32 to vector<1x288xi32>
    %8 = arith.cmpi slt, %4, %7 : vector<1x288xi32>
    %c0_i32_2 = arith.constant 0 : i32
    %9 = arith.cmpi slt, %2, %c0_i32_2 : i32
    %10 = vector.broadcast %9 : i1 to vector<1x288xi1>
    %11 = vector.broadcast %10 : vector<1x288xi1> to vector<1x288xi1>
    %12 = arith.xori %8, %11 : vector<1x288xi1>
    %13 = arith.andi %12, %6 : vector<1x288xi1>
    %14 = vector.broadcast %2 : i32 to vector<1x288xi32>
    %15 = arith.addi %4, %14 : vector<1x288xi32>
    %16 = arith.select %13, %15, %4 : vector<1x288xi1>, vector<1x288xi32>
    %c0_i32_3 = arith.constant 0 : i32
    %17 = vector.broadcast %c0_i32_3 : i32 to vector<1x288xi32>
    %18 = arith.cmpi ne, %16, %17 : vector<1x288xi32>
    %c15_i32 = arith.constant 15 : i32
    %19 = vector.broadcast %c15_i32 : i32 to vector<1x288xi32>
    %20 = arith.cmpi ne, %16, %19 : vector<1x288xi32>
    %c16_i32_4 = arith.constant 16 : i32
    %21 = vector.broadcast %c16_i32_4 : i32 to vector<1x288xi32>
    %22 = arith.cmpi slt, %0, %21 : vector<1x288xi32>
    %c272_i32 = arith.constant 272 : i32
    %23 = vector.broadcast %c272_i32 : i32 to vector<1x288xi32>
    %24 = arith.cmpi sge, %0, %23 : vector<1x288xi32>
    %25 = arith.ori %22, %24 : vector<1x288xi1>
    %c0 = arith.constant 0 : index
    %c0_5 = arith.constant 0 : index
    %c0_6 = arith.constant 0 : index
    %26 = vector.load %arg1[%c0, %c0_5, %c0_6] : memref<1x8x256xf32, #tpu.memory_space<vmem>>, vector<1x8x256xf32>
    %27 = vector.shape_cast %26 : vector<1x8x256xf32> to vector<8x256xf32>
    %cst = arith.constant 0.000000e+00 : f32
    %28 = vector.broadcast %cst : f32 to vector<8x16xf32>
    %29 = tpu.concatenate %28, %27, %28 in 1 : vector<8x16xf32>, vector<8x256xf32>, vector<8x16xf32> -> vector<8x288xf32>
    %cst_7 = arith.constant 0.000000e+00 : f32
    %30 = vector.broadcast %cst_7 : f32 to vector<8x32xf32>
    %31 = tpu.concatenate %30, %29, %30 in 1 : vector<8x32xf32>, vector<8x288xf32>, vector<8x32xf32> -> vector<8x352xf32>
    %32 = vector.extract_strided_slice %31 {offsets = [0, 15], sizes = [8, 288], strides = [1, 1]} : vector<8x352xf32> to vector<8x288xf32>
    %cst_8 = arith.constant 0.000000e+00 : f32
    %33 = vector.shape_cast %18 : vector<1x288xi1> to vector<1x288xi1>
    %34 = vector.broadcast %33 : vector<1x288xi1> to vector<8x288xi1>
    %35 = vector.broadcast %cst_8 : f32 to vector<8x288xf32>
    %36 = arith.select %34, %32, %35 : vector<8x288xi1>, vector<8x288xf32>
    %37 = vector.extract_strided_slice %31 {offsets = [0, 16], sizes = [8, 288], strides = [1, 1]} : vector<8x352xf32> to vector<8x288xf32>
    %38 = vector.extract_strided_slice %31 {offsets = [0, 17], sizes = [8, 288], strides = [1, 1]} : vector<8x352xf32> to vector<8x288xf32>
    %cst_9 = arith.constant 0.000000e+00 : f32
    %39 = vector.shape_cast %20 : vector<1x288xi1> to vector<1x288xi1>
    %40 = vector.broadcast %39 : vector<1x288xi1> to vector<8x288xi1>
    %41 = vector.broadcast %cst_9 : f32 to vector<8x288xf32>
    %42 = arith.select %40, %38, %41 : vector<8x288xi1>, vector<8x288xf32>
    %43 = vector.extract_strided_slice %31 {offsets = [0, 31], sizes = [8, 288], strides = [1, 1]} : vector<8x352xf32> to vector<8x288xf32>
    %cst_10 = arith.constant 0.000000e+00 : f32
    %44 = vector.shape_cast %18 : vector<1x288xi1> to vector<1x288xi1>
    %45 = vector.broadcast %44 : vector<1x288xi1> to vector<8x288xi1>
    %46 = vector.broadcast %cst_10 : f32 to vector<8x288xf32>
    %47 = arith.select %45, %43, %46 : vector<8x288xi1>, vector<8x288xf32>
    %48 = vector.extract_strided_slice %31 {offsets = [0, 32], sizes = [8, 288], strides = [1, 1]} : vector<8x352xf32> to vector<8x288xf32>
    %49 = vector.extract_strided_slice %31 {offsets = [0, 33], sizes = [8, 288], strides = [1, 1]} : vector<8x352xf32> to vector<8x288xf32>
    %cst_11 = arith.constant 0.000000e+00 : f32
    %50 = vector.shape_cast %20 : vector<1x288xi1> to vector<1x288xi1>
    %51 = vector.broadcast %50 : vector<1x288xi1> to vector<8x288xi1>
    %52 = vector.broadcast %cst_11 : f32 to vector<8x288xf32>
    %53 = arith.select %51, %49, %52 : vector<8x288xi1>, vector<8x288xf32>
    %54 = vector.extract_strided_slice %31 {offsets = [0, 47], sizes = [8, 288], strides = [1, 1]} : vector<8x352xf32> to vector<8x288xf32>
    %cst_12 = arith.constant 0.000000e+00 : f32
    %55 = vector.shape_cast %18 : vector<1x288xi1> to vector<1x288xi1>
    %56 = vector.broadcast %55 : vector<1x288xi1> to vector<8x288xi1>
    %57 = vector.broadcast %cst_12 : f32 to vector<8x288xf32>
    %58 = arith.select %56, %54, %57 : vector<8x288xi1>, vector<8x288xf32>
    %59 = vector.extract_strided_slice %31 {offsets = [0, 48], sizes = [8, 288], strides = [1, 1]} : vector<8x352xf32> to vector<8x288xf32>
    %60 = vector.extract_strided_slice %31 {offsets = [0, 49], sizes = [8, 288], strides = [1, 1]} : vector<8x352xf32> to vector<8x288xf32>
    %cst_13 = arith.constant 0.000000e+00 : f32
    %61 = vector.shape_cast %20 : vector<1x288xi1> to vector<1x288xi1>
    %62 = vector.broadcast %61 : vector<1x288xi1> to vector<8x288xi1>
    %63 = vector.broadcast %cst_13 : f32 to vector<8x288xf32>
    %64 = arith.select %62, %60, %63 : vector<8x288xi1>, vector<8x288xf32>
    %65 = tpu.concatenate %36, %37, %42, %47, %48, %53, %58, %59, %64 in 0 : vector<8x288xf32>, vector<8x288xf32>, vector<8x288xf32>, vector<8x288xf32>, vector<8x288xf32>, vector<8x288xf32>, vector<8x288xf32>, vector<8x288xf32>, vector<8x288xf32> -> vector<72x288xf32>
    %c0_14 = arith.constant 0 : index
    %c0_15 = arith.constant 0 : index
    %66 = vector.load %arg2[%c0_14, %c0_15] : memref<8x72xf32, #tpu.memory_space<vmem>>, vector<8x72xf32>
    %cst_16 = arith.constant dense<0.000000e+00> : vector<8x288xf32>
    %67 = tpu.matmul %66, %65, %cst_16 {dimension_numbers = #tpu.dot_dimension_numbers<[1], [0], [0], [1], [0, 0, 1, 1], [], []>} : vector<8x72xf32>, vector<72x288xf32>, vector<8x288xf32> -> vector<8x288xf32>
    %c0_17 = arith.constant 0 : index
    %c0_18 = arith.constant 0 : index
    %68 = vector.load %arg3[%c0_17, %c0_18] : memref<8x1xf32, #tpu.memory_space<vmem>>, vector<8x1xf32>
    %69 = vector.broadcast %68 : vector<8x1xf32> to vector<8x288xf32>
    %70 = arith.mulf %67, %69 : vector<8x288xf32>
    %c0_19 = arith.constant 0 : index
    %c0_20 = arith.constant 0 : index
    %71 = vector.load %arg4[%c0_19, %c0_20] : memref<8x1xf32, #tpu.memory_space<vmem>>, vector<8x1xf32>
    %72 = vector.broadcast %71 : vector<8x1xf32> to vector<8x288xf32>
    %73 = arith.addf %70, %72 : vector<8x288xf32>
    %cst_21 = arith.constant 0.000000e+00 : f32
    %74 = vector.broadcast %cst_21 : f32 to vector<8x288xf32>
    %75 = arith.maximumf %73, %74 : vector<8x288xf32>
    %cst_22 = arith.constant 0.000000e+00 : f32
    %76 = vector.shape_cast %25 : vector<1x288xi1> to vector<1x288xi1>
    %77 = vector.broadcast %76 : vector<1x288xi1> to vector<8x288xi1>
    %78 = vector.broadcast %cst_22 : f32 to vector<8x288xf32>
    %79 = arith.select %77, %78, %75 : vector<8x288xi1>, vector<8x288xf32>
    %cst_23 = arith.constant 0.000000e+00 : f32
    %80 = vector.broadcast %cst_23 : f32 to vector<8x32xf32>
    %81 = tpu.concatenate %80, %79, %80 in 1 : vector<8x32xf32>, vector<8x288xf32>, vector<8x32xf32> -> vector<8x352xf32>
    %82 = vector.extract_strided_slice %81 {offsets = [0, 15], sizes = [8, 288], strides = [1, 1]} : vector<8x352xf32> to vector<8x288xf32>
    %cst_24 = arith.constant 0.000000e+00 : f32
    %83 = vector.shape_cast %18 : vector<1x288xi1> to vector<1x288xi1>
    %84 = vector.broadcast %83 : vector<1x288xi1> to vector<8x288xi1>
    %85 = vector.broadcast %cst_24 : f32 to vector<8x288xf32>
    %86 = arith.select %84, %82, %85 : vector<8x288xi1>, vector<8x288xf32>
    %87 = vector.extract_strided_slice %81 {offsets = [0, 16], sizes = [8, 288], strides = [1, 1]} : vector<8x352xf32> to vector<8x288xf32>
    %88 = vector.extract_strided_slice %81 {offsets = [0, 17], sizes = [8, 288], strides = [1, 1]} : vector<8x352xf32> to vector<8x288xf32>
    %cst_25 = arith.constant 0.000000e+00 : f32
    %89 = vector.shape_cast %20 : vector<1x288xi1> to vector<1x288xi1>
    %90 = vector.broadcast %89 : vector<1x288xi1> to vector<8x288xi1>
    %91 = vector.broadcast %cst_25 : f32 to vector<8x288xf32>
    %92 = arith.select %90, %88, %91 : vector<8x288xi1>, vector<8x288xf32>
    %93 = vector.extract_strided_slice %81 {offsets = [0, 31], sizes = [8, 288], strides = [1, 1]} : vector<8x352xf32> to vector<8x288xf32>
    %cst_26 = arith.constant 0.000000e+00 : f32
    %94 = vector.shape_cast %18 : vector<1x288xi1> to vector<1x288xi1>
    %95 = vector.broadcast %94 : vector<1x288xi1> to vector<8x288xi1>
    %96 = vector.broadcast %cst_26 : f32 to vector<8x288xf32>
    %97 = arith.select %95, %93, %96 : vector<8x288xi1>, vector<8x288xf32>
    %98 = vector.extract_strided_slice %81 {offsets = [0, 32], sizes = [8, 288], strides = [1, 1]} : vector<8x352xf32> to vector<8x288xf32>
    %99 = vector.extract_strided_slice %81 {offsets = [0, 33], sizes = [8, 288], strides = [1, 1]} : vector<8x352xf32> to vector<8x288xf32>
    %cst_27 = arith.constant 0.000000e+00 : f32
    %100 = vector.shape_cast %20 : vector<1x288xi1> to vector<1x288xi1>
    %101 = vector.broadcast %100 : vector<1x288xi1> to vector<8x288xi1>
    %102 = vector.broadcast %cst_27 : f32 to vector<8x288xf32>
    %103 = arith.select %101, %99, %102 : vector<8x288xi1>, vector<8x288xf32>
    %104 = vector.extract_strided_slice %81 {offsets = [0, 47], sizes = [8, 288], strides = [1, 1]} : vector<8x352xf32> to vector<8x288xf32>
    %cst_28 = arith.constant 0.000000e+00 : f32
    %105 = vector.shape_cast %18 : vector<1x288xi1> to vector<1x288xi1>
    %106 = vector.broadcast %105 : vector<1x288xi1> to vector<8x288xi1>
    %107 = vector.broadcast %cst_28 : f32 to vector<8x288xf32>
    %108 = arith.select %106, %104, %107 : vector<8x288xi1>, vector<8x288xf32>
    %109 = vector.extract_strided_slice %81 {offsets = [0, 48], sizes = [8, 288], strides = [1, 1]} : vector<8x352xf32> to vector<8x288xf32>
    %110 = vector.extract_strided_slice %81 {offsets = [0, 49], sizes = [8, 288], strides = [1, 1]} : vector<8x352xf32> to vector<8x288xf32>
    %cst_29 = arith.constant 0.000000e+00 : f32
    %111 = vector.shape_cast %20 : vector<1x288xi1> to vector<1x288xi1>
    %112 = vector.broadcast %111 : vector<1x288xi1> to vector<8x288xi1>
    %113 = vector.broadcast %cst_29 : f32 to vector<8x288xf32>
    %114 = arith.select %112, %110, %113 : vector<8x288xi1>, vector<8x288xf32>
    %115 = tpu.concatenate %86, %87, %92, %97, %98, %103, %108, %109, %114 in 0 : vector<8x288xf32>, vector<8x288xf32>, vector<8x288xf32>, vector<8x288xf32>, vector<8x288xf32>, vector<8x288xf32>, vector<8x288xf32>, vector<8x288xf32>, vector<8x288xf32> -> vector<72x288xf32>
    %c0_30 = arith.constant 0 : index
    %c0_31 = arith.constant 0 : index
    %116 = vector.load %arg5[%c0_30, %c0_31] : memref<8x72xf32, #tpu.memory_space<vmem>>, vector<8x72xf32>
    %cst_32 = arith.constant dense<0.000000e+00> : vector<8x288xf32>
    %117 = tpu.matmul %116, %115, %cst_32 {dimension_numbers = #tpu.dot_dimension_numbers<[1], [0], [0], [1], [0, 0, 1, 1], [], []>} : vector<8x72xf32>, vector<72x288xf32>, vector<8x288xf32> -> vector<8x288xf32>
    %c0_33 = arith.constant 0 : index
    %c0_34 = arith.constant 0 : index
    %118 = vector.load %arg6[%c0_33, %c0_34] : memref<8x1xf32, #tpu.memory_space<vmem>>, vector<8x1xf32>
    %119 = vector.broadcast %118 : vector<8x1xf32> to vector<8x288xf32>
    %120 = arith.mulf %117, %119 : vector<8x288xf32>
    %c0_35 = arith.constant 0 : index
    %c0_36 = arith.constant 0 : index
    %121 = vector.load %arg7[%c0_35, %c0_36] : memref<8x1xf32, #tpu.memory_space<vmem>>, vector<8x1xf32>
    %122 = vector.broadcast %121 : vector<8x1xf32> to vector<8x288xf32>
    %123 = arith.addf %120, %122 : vector<8x288xf32>
    %124 = vector.extract_strided_slice %123 {offsets = [0, 16], sizes = [8, 256], strides = [1, 1]} : vector<8x288xf32> to vector<8x256xf32>
    %125 = arith.addf %124, %27 : vector<8x256xf32>
    %cst_37 = arith.constant 0.000000e+00 : f32
    %126 = vector.broadcast %cst_37 : f32 to vector<8x256xf32>
    %127 = arith.maximumf %125, %126 : vector<8x256xf32>
    %c0_38 = arith.constant 0 : index
    %c0_39 = arith.constant 0 : index
    %c0_40 = arith.constant 0 : index
    %128 = vector.load %arg8[%c0_38, %c0_39, %c0_40] : memref<1x8x256xf32, #tpu.memory_space<vmem>>, vector<1x8x256xf32>
    %129 = vector.shape_cast %128 : vector<1x8x256xf32> to vector<8x256xf32>
    %130 = vector.shape_cast %127 : vector<8x256xf32> to vector<1x8x256xf32>
    tpu.vector_store %arg8[%c0_38, %c0_39, %c0_40], %130 {strides = array<i32>} : memref<1x8x256xf32, #tpu.memory_space<vmem>>, vector<1x8x256xf32>,
    return
  }
  func.func @transform_0(%arg0: i32) -> (i32, i32, i32) {
    %c0_i32 = arith.constant 0 : i32
    %c0_i32_0 = arith.constant 0 : i32
    %c0_i32_1 = arith.constant 0 : i32
    return %arg0, %c0_i32, %c0_i32_0 : i32, i32, i32
  }
  func.func @transform_1(%arg0: i32) -> (i32, i32) {
    %c0_i32 = arith.constant 0 : i32
    %c0_i32_0 = arith.constant 0 : i32
    %c0_i32_1 = arith.constant 0 : i32
    return %c0_i32, %c0_i32_0 : i32, i32
  }
  func.func @transform_2(%arg0: i32) -> (i32, i32) {
    %c0_i32 = arith.constant 0 : i32
    %c0_i32_0 = arith.constant 0 : i32
    %c0_i32_1 = arith.constant 0 : i32
    return %c0_i32, %c0_i32_0 : i32, i32
  }
  func.func @transform_3(%arg0: i32) -> (i32, i32) {
    %c0_i32 = arith.constant 0 : i32
    %c0_i32_0 = arith.constant 0 : i32
    %c0_i32_1 = arith.constant 0 : i32
    return %c0_i32, %c0_i32_0 : i32, i32
  }
  func.func @transform_4(%arg0: i32) -> (i32, i32) {
    %c0_i32 = arith.constant 0 : i32
    %c0_i32_0 = arith.constant 0 : i32
    %c0_i32_1 = arith.constant 0 : i32
    return %c0_i32, %c0_i32_0 : i32, i32
  }
  func.func @transform_5(%arg0: i32) -> (i32, i32) {
    %c0_i32 = arith.constant 0 : i32
    %c0_i32_0 = arith.constant 0 : i32
    %c0_i32_1 = arith.constant 0 : i32
    return %c0_i32, %c0_i32_0 : i32, i32
  }
  func.func @transform_6(%arg0: i32) -> (i32, i32) {
    %c0_i32 = arith.constant 0 : i32
    %c0_i32_0 = arith.constant 0 : i32
    %c0_i32_1 = arith.constant 0 : i32
    return %c0_i32, %c0_i32_0 : i32, i32
  }
  func.func @transform_7(%arg0: i32) -> (i32, i32, i32) {
    %c0_i32 = arith.constant 0 : i32
    %c0_i32_0 = arith.constant 0 : i32
    %c0_i32_1 = arith.constant 0 : i32
    return %arg0, %c0_i32, %c0_i32_0 : i32, i32, i32
  }
}

</mosaic_0001>

<llo_original>
// kernel: tpu_custom_call.1
$region0: #{tpu_custom_call.1}
  #allocation0 [shape = 'u32[]', space=smem, size = 0x4, offset = 0x4, fixed_abs, tag = 'smem constant byte address 0x4 - core index']
  #allocation1 [shape = 'u32[144,128]{1,0:T(1,128)}', space=vmem, size = 0x12000, scoped, tag = 'internal scratch']
  %s0 = inlined_call_operand.vmem [shape: f32[2,8,256], index: 0, kind: input, shape index: {}]
  %s1 = inlined_call_operand.hbm [shape: f32[8,72], index: 1, kind: input, shape index: {}]
  %s2 = inlined_call_operand.vmem [shape: f32[8,1], index: 2, kind: input, shape index: {}]
  %s3 = inlined_call_operand.vmem [shape: f32[8,1], index: 3, kind: input, shape index: {}]
  %s4 = inlined_call_operand.vmem [shape: f32[8,72], index: 4, kind: input, shape index: {}]
  %s5 = inlined_call_operand.vmem [shape: f32[8,1], index: 5, kind: input, shape index: {}]
  %s6 = inlined_call_operand.vmem [shape: f32[8,1], index: 6, kind: input, shape index: {}]
  %s7 = inlined_call_operand.hbm [shape: f32[2,8,256], index: 7, kind: output, shape index: {}]
  %s8 = sld [smem:[#allocation0]]
  $region65: #{tpu_custom_call.1} parent=0
    _
  %s10 = ssub.s32 1, %s8
  %s11 = scalar_select 0, %s10, %s8
  $region1: #{tpu_custom_call.1} parent=0
    #allocation2 [shape = 'u8[4096]{0}', space=vmem, size = 0x1000, scoped, tag = 'input window, operand 1, single buffered']
    #allocation3 [shape = 's32[2]{0}', space=sflag, size = 0x8, scoped, tag = 'scoped memory for tpu_custom_call.1']
    #allocation4 [shape = 's32[2]{0}', space=sflag, size = 0x8, scoped, tag = 'scoped memory for tpu_custom_call.1']
    #allocation5 [shape = 'u8[16384]{0}', space=vmem, size = 0x4000, scoped, tag = 'output window, operand 0']
    %12 = vsyncpa [#allocation3], 0
    %13 = vsyncpa [#allocation4], 0
    %s14 = scalar_lea.sflag [#allocation4], 1
    %15 = vsyncpa %s14, 0
    loop: start=0, step=1, limit=4
    $region2: #{tpu_custom_call.1} parent=1 // loop_pre_header
      _
    $region3: #{tpu_custom_call.1} parent=1 // loop_header
      %s17 = sphi 0, %s21
      %p18 = scmp.ge.s32.totalorder %s17, 4
      %s27 = sphi 0, %s29
      %s30 = sphi 0, %s27
      %s31 = sphi 0, %s30
      %s47 = sphi 0, %s31
      %s51 = sphi 0, %s51
      %s53 = sphi 0, %s51
      %s54 = sphi 0, %s53
      %s68 = sphi 0, %s54
      %s72 = sphi 0, %s72
      %s74 = sphi 0, %s72
      %s75 = sphi 0, %s74
      %s89 = sphi 0, %s75
      %s93 = sphi 0, %s93
      %s95 = sphi 0, %s93
      %s96 = sphi 0, %s95
      %s110 = sphi 0, %s96
      %s114 = sphi 0, %s114
      %s116 = sphi 0, %s114
      %s117 = sphi 0, %s116
      %s131 = sphi 0, %s117
      %s135 = sphi 0, %s135
      %s137 = sphi 0, %s135
      %s138 = sphi 0, %s137
      %s152 = sphi 0, %s138
      %s156 = sphi 0, %s156
      %s158 = sphi 0, %s156
      %s159 = sphi 0, %s158
      %s173 = sphi 0, %s159
      %s179 = sphi 0, %s181
      %s182 = sphi 0, %s179
      %s183 = sphi 0, %s182
      %s199 = sphi 0, %s183
    $region4: #{tpu_custom_call.1} parent=1 // loop_header_branch
      %20 = sbr.rel (%p18) target = $region8
    $region5: #{tpu_custom_call.1} parent=1 // loop_body
      %s22 = ssub.s32 %s17, 1
      %s23 = ssub.s32 %s17, 2
      %s24 = sadd.s32 %s17, 1
      %s25 = ssub.s32 %s17, %s24
      %p26 = scmp.eq.s32.totalorder %s25, 0
      %s28 = sadd.s32 %s27, 1
      %s29 = scalar_select %p26, %s27, %s28
      %p32 = pneg %p26
      %p33 = scmp.eq.s32.totalorder %s17, 1
      %p34 = por %p32, %p33
      %p35 = scmp.ne.s32.totalorder %s27, %s30
      %p36 = scmp.eq.s32.totalorder %s17, 0
      %p37 = por %p35, %p36
      %p38 = scmp.ne.s32.totalorder %s27, %s30
      %p39 = scmp.eq.s32.totalorder %s22, 1
      %p40 = por %p38, %p39
      %p41 = scmp.ne.s32.totalorder %s30, %s31
      %p42 = scmp.eq.s32.totalorder %s22, 0
      %p43 = por %p41, %p42
      %p44 = scmp.ne.s32.totalorder %s30, %s31
      %p45 = scmp.eq.s32.totalorder %s23, 1
      %p46 = por %p44, %p45
      %p48 = scmp.ne.s32.totalorder %s31, %s47
      %p49 = scmp.eq.s32.totalorder %s23, 0
      %p50 = por %p48, %p49
      %s52 = sadd.s32 %s51, 1
      %p55 = scmp.eq.s32.totalorder %s17, 1
      %p56 = scmp.ne.s32.totalorder %s51, %s53
      %p57 = scmp.eq.s32.totalorder %s17, 0
      %p58 = por %p56, %p57
      %p59 = scmp.ne.s32.totalorder %s51, %s53
      %p60 = scmp.eq.s32.totalorder %s22, 1
      %p61 = por %p59, %p60
      %p62 = scmp.ne.s32.totalorder %s53, %s54
      %p63 = scmp.eq.s32.totalorder %s22, 0
      %p64 = por %p62, %p63
      %p65 = scmp.ne.s32.totalorder %s53, %s54
      %p66 = scmp.eq.s32.totalorder %s23, 1
      %p67 = por %p65, %p66
      %p69 = scmp.ne.s32.totalorder %s54, %s68
      %p70 = scmp.eq.s32.totalorder %s23, 0
      %p71 = por %p69, %p70
      %s73 = sadd.s32 %s72, 1
      %p76 = scmp.eq.s32.totalorder %s17, 1
      %p77 = scmp.ne.s32.totalorder %s72, %s74
      %p78 = scmp.eq.s32.totalorder %s17, 0
      %p79 = por %p77, %p78
      %p80 = scmp.ne.s32.totalorder %s72, %s74
      %p81 = scmp.eq.s32.totalorder %s22, 1
      %p82 = por %p80, %p81
      %p83 = scmp.ne.s32.totalorder %s74, %s75
      %p84 = scmp.eq.s32.totalorder %s22, 0
      %p85 = por %p83, %p84
      %p86 = scmp.ne.s32.totalorder %s74, %s75
      %p87 = scmp.eq.s32.totalorder %s23, 1
      %p88 = por %p86, %p87
      %p90 = scmp.ne.s32.totalorder %s75, %s89
      %p91 = scmp.eq.s32.totalorder %s23, 0
      %p92 = por %p90, %p91
      %s94 = sadd.s32 %s93, 1
      %p97 = scmp.eq.s32.totalorder %s17, 1
      %p98 = scmp.ne.s32.totalorder %s93, %s95
      %p99 = scmp.eq.s32.totalorder %s17, 0
      %p100 = por %p98, %p99
      %p101 = scmp.ne.s32.totalorder %s93, %s95
      %p102 = scmp.eq.s32.totalorder %s22, 1
      %p103 = por %p101, %p102
      %p104 = scmp.ne.s32.totalorder %s95, %s96
      %p105 = scmp.eq.s32.totalorder %s22, 0
      %p106 = por %p104, %p105
      %p107 = scmp.ne.s32.totalorder %s95, %s96
      %p108 = scmp.eq.s32.totalorder %s23, 1
      %p109 = por %p107, %p108
      %p111 = scmp.ne.s32.totalorder %s96, %s110
      %p112 = scmp.eq.s32.totalorder %s23, 0
      %p113 = por %p111, %p112
      %s115 = sadd.s32 %s114, 1
      %p118 = scmp.eq.s32.totalorder %s17, 1
      %p119 = scmp.ne.s32.totalorder %s114, %s116
      %p120 = scmp.eq.s32.totalorder %s17, 0
      %p121 = por %p119, %p120
      %p122 = scmp.ne.s32.totalorder %s114, %s116
      %p123 = scmp.eq.s32.totalorder %s22, 1
      %p124 = por %p122, %p123
      %p125 = scmp.ne.s32.totalorder %s116, %s117
      %p126 = scmp.eq.s32.totalorder %s22, 0
      %p127 = por %p125, %p126
      %p128 = scmp.ne.s32.totalorder %s116, %s117
      %p129 = scmp.eq.s32.totalorder %s23, 1
      %p130 = por %p128, %p129
      %p132 = scmp.ne.s32.totalorder %s117, %s131
      %p133 = scmp.eq.s32.totalorder %s23, 0
      %p134 = por %p132, %p133
      %s136 = sadd.s32 %s135, 1
      %p139 = scmp.eq.s32.totalorder %s17, 1
      %p140 = scmp.ne.s32.totalorder %s135, %s137
      %p141 = scmp.eq.s32.totalorder %s17, 0
      %p142 = por %p140, %p141
      %p143 = scmp.ne.s32.totalorder %s135, %s137
      %p144 = scmp.eq.s32.totalorder %s22, 1
      %p145 = por %p143, %p144
      %p146 = scmp.ne.s32.totalorder %s137, %s138
      %p147 = scmp.eq.s32.totalorder %s22, 0
      %p148 = por %p146, %p147
      %p149 = scmp.ne.s32.totalorder %s137, %s138
      %p150 = scmp.eq.s32.totalorder %s23, 1
      %p151 = por %p149, %p150
      %p153 = scmp.ne.s32.totalorder %s138, %s152
      %p154 = scmp.eq.s32.totalorder %s23, 0
      %p155 = por %p153, %p154
      %s157 = sadd.s32 %s156, 1
      %p160 = scmp.eq.s32.totalorder %s17, 1
      %p161 = scmp.ne.s32.totalorder %s156, %s158
      %p162 = scmp.eq.s32.totalorder %s17, 0
      %p163 = por %p161, %p162
      %p164 = scmp.ne.s32.totalorder %s156, %s158
      %p165 = scmp.eq.s32.totalorder %s22, 1
      %p166 = por %p164, %p165
      %p167 = scmp.ne.s32.totalorder %s158, %s159
      %p168 = scmp.eq.s32.totalorder %s22, 0
      %p169 = por %p167, %p168
      %p170 = scmp.ne.s32.totalorder %s158, %s159
      %p171 = scmp.eq.s32.totalorder %s23, 1
      %p172 = por %p170, %p171
      %p174 = scmp.ne.s32.totalorder %s159, %s173
      %p175 = scmp.eq.s32.totalorder %s23, 0
      %p176 = por %p174, %p175
      %s177 = ssub.s32 %s17, %s24
      %p178 = scmp.eq.s32.totalorder %s177, 0
      %s180 = sadd.s32 %s179, 1
      %s181 = scalar_select %p178, %s179, %s180
      %p184 = pneg %p178
      %p185 = scmp.eq.s32.totalorder %s17, 1
      %p186 = por %p184, %p185
      %p187 = scmp.ne.s32.totalorder %s179, %s182
      %p188 = scmp.eq.s32.totalorder %s17, 0
      %p189 = por %p187, %p188
      %p190 = scmp.ne.s32.totalorder %s179, %s182
      %p191 = scmp.eq.s32.totalorder %s22, 1
      %p192 = por %p190, %p191
      %p193 = scmp.ne.s32.totalorder %s182, %s183
      %p194 = scmp.eq.s32.totalorder %s22, 0
      %p195 = por %p193, %p194
      %p196 = scmp.ne.s32.totalorder %s182, %s183
      %p197 = scmp.eq.s32.totalorder %s23, 1
      %p198 = por %p196, %p197
      %p200 = scmp.ne.s32.totalorder %s183, %s199
      %p201 = scmp.eq.s32.totalorder %s23, 0
      %p202 = por %p200, %p201
      %p203 = scmp.le.s32.totalorder 1, %s17
      %p204 = scmp.lt.s32.totalorder %s17, 3
      %p205 = pnand %p203, %p204
      %p206 = pneg %p205
      // Predicated region
      $region9: #{tpu_custom_call.1} parent=5 // pred_check
        _
      $region10: #{tpu_custom_call.1} parent=5 // pred_check_branch
        %208 = sbr.rel (%p205) target = $region12
      $region11: #{tpu_custom_call.1} parent=5 // pred_region
        %s209 = ssub.s32 %s17, 1
        // Predicated region
        $region13: #{tpu_custom_call.1} parent=11 // pred_check
          %p210 = pneg %p64
        $region14: #{tpu_custom_call.1} parent=11 // pred_check_branch
          %212 = sbr.rel (%p210) target = $region16
        $region15: #{tpu_custom_call.1} parent=11 // pred_region
          %s214 = ssub.s32 128, 128
          %215 = vsyncadd [#allocation3], %s214
          %s217 = sshll.u32 [#allocation2], 4
          %s218 = int_to_ptr.vmem [resolvable:$true] %s217
          %220 = dma.hbm_to_vmem [thread:$0]  %s1, 128, %s218, [#allocation3]
        $region16: #{tpu_custom_call.1} parent=11 // pred_fallthru
          _
        // Predicated region
        $region17: #{tpu_custom_call.1} parent=11 // pred_check
          %p221 = pneg %p85
        $region18: #{tpu_custom_call.1} parent=11 // pred_check_branch
          %223 = sbr.rel (%p221) target = $region20
        $region19: #{tpu_custom_call.1} parent=11 // pred_region
          _
        $region20: #{tpu_custom_call.1} parent=11 // pred_fallthru
          _
        // Predicated region
        $region21: #{tpu_custom_call.1} parent=11 // pred_check
          %p224 = pneg %p106
        $region22: #{tpu_custom_call.1} parent=11 // pred_check_branch
          %226 = sbr.rel (%p224) target = $region24
        $region23: #{tpu_custom_call.1} parent=11 // pred_region
          _
        $region24: #{tpu_custom_call.1} parent=11 // pred_fallthru
          _
        // Predicated region
        $region25: #{tpu_custom_call.1} parent=11 // pred_check
          %p227 = pneg %p127
        $region26: #{tpu_custom_call.1} parent=11 // pred_check_branch
          %229 = sbr.rel (%p227) target = $region28
        $region27: #{tpu_custom_call.1} parent=11 // pred_region
          _
        $region28: #{tpu_custom_call.1} parent=11 // pred_fallthru
          _
        // Predicated region
        $region29: #{tpu_custom_call.1} parent=11 // pred_check
          %p230 = pneg %p148
        $region30: #{tpu_custom_call.1} parent=11 // pred_check_branch
          %232 = sbr.rel (%p230) target = $region32
        $region31: #{tpu_custom_call.1} parent=11 // pred_region
          _
        $region32: #{tpu_custom_call.1} parent=11 // pred_fallthru
          _
        // Predicated region
        $region33: #{tpu_custom_call.1} parent=11 // pred_check
          %p233 = pneg %p169
        $region34: #{tpu_custom_call.1} parent=11 // pred_check_branch
          %235 = sbr.rel (%p233) target = $region36
        $region35: #{tpu_custom_call.1} parent=11 // pred_region
          _
        $region36: #{tpu_custom_call.1} parent=11 // pred_fallthru
          _
      $region12: #{tpu_custom_call.1} parent=5 // pred_fallthru
        _
      %p236 = scmp.lt.s32.totalorder %s17, 2
      // Predicated region
      $region37: #{tpu_custom_call.1} parent=5 // pred_check
        %p237 = pneg %p236
      $region38: #{tpu_custom_call.1} parent=5 // pred_check_branch
        %239 = sbr.rel (%p237) target = $region40
      $region39: #{tpu_custom_call.1} parent=5 // pred_region
        // Predicated region
        $region41: #{tpu_custom_call.1} parent=39 // pred_check
          %p240 = pneg %p37
        $region42: #{tpu_custom_call.1} parent=39 // pred_check_branch
          %242 = sbr.rel (%p240) target = $region44
        $region43: #{tpu_custom_call.1} parent=39 // pred_region
          %p243 = scmp.lt.s32.totalorder %s17, 1
          %s244 = scalar_select %p243, %s17, 1
          %s245 = smul.addr %s244, 2
          %s246 = smul.addr %s245, 8
          %s247 = scalar_lea.vmem %s0, %s246
        $region44: #{tpu_custom_call.1} parent=39 // pred_fallthru
          _
      $region40: #{tpu_custom_call.1} parent=5 // pred_fallthru
        _
      %p248 = scmp.le.s32.totalorder 1, %s17
      %p249 = scmp.lt.s32.totalorder %s17, 3
      %p250 = pnand %p248, %p249
      %p251 = pneg %p250
      // Predicated region
      $region45: #{tpu_custom_call.1} parent=5 // pred_check
        _
      $region46: #{tpu_custom_call.1} parent=5 // pred_check_branch
        %253 = sbr.rel (%p250) target = $region48
      $region47: #{tpu_custom_call.1} parent=5 // pred_region
        %s254 = ssub.s32 %s17, 1
        // Predicated region
        $region49: #{tpu_custom_call.1} parent=47 // pred_check
          %p255 = pneg %p64
        $region50: #{tpu_custom_call.1} parent=47 // pred_check_branch
          %257 = sbr.rel (%p255) target = $region52
        $region51: #{tpu_custom_call.1} parent=47 // pred_region
          %258 = dma.done [#allocation3], 128
        $region52: #{tpu_custom_call.1} parent=47 // pred_fallthru
          _
        %p259 = scmp.lt.s32.totalorder %s22, 1
        %s260 = scalar_select %p259, %s22, 1
        %s261 = smul.addr %s260, 2
        %s262 = smul.addr %s261, 8
        %s263 = scalar_lea.vmem %s0, %s262
        %p264 = pneg %p43
        %p265 = pneg %p40
        %p266 = pneg %p64
        %p267 = pneg %p61
        %p268 = pneg %p85
        %p269 = pneg %p82
        %p270 = pneg %p106
        %p271 = pneg %p103
        %p272 = pneg %p127
        %p273 = pneg %p124
        %p274 = pneg %p148
        %p275 = pneg %p145
        %p276 = pneg %p169
        %p277 = pneg %p166
        %p278 = pneg %p195
        %p279 = pneg %p192
        %s280 = sand.u32 %s182, 1
        %s281 = scalar_lea.sflag [#allocation4], %s280
        %s282 = sand.u32 %s182, 1
        %s283 = smul.addr %s282, 16
        %s284 = scalar_lea.vmem [#allocation5], %s283
        %p285 = scmp.lt.s32.totalorder %s22, 1
        %s286 = scalar_select %p285, %s22, 1
        %s287 = smul.addr %s286, 2
        %s288 = smul.addr %s287, 8
        %s289 = scalar_lea.vmem %s0, %s288
        %v290 = vlaneseq
        %v291 = vand.u32 %v290, 127
        %v292 = vadd.s32 %v291, 128
        %v293 = vadd.s32 %v291, 256
        %vm294 = vcmp.lt.s32.totalorder %v291, 0
        %v295 = vsub.s32 0, %v291
        %v296 = vsel %vm294, %v295, %v291
        %v297 = vshrl.u32 %v296, 4
        %v298 = vand.u32 %v296, 15
        %v299 = vsub.s32 0, %v298
        %v300 = vsel %vm294, %v299, %v298
        %vm301 = vcmp.lt.s32.totalorder %v292, 0
        %v302 = vsub.s32 0, %v292
        %v303 = vsel %vm301, %v302, %v292
        %v304 = vshrl.u32 %v303, 4
        %v305 = vand.u32 %v303, 15
        %v306 = vsub.s32 0, %v305
        %v307 = vsel %vm301, %v306, %v305
        %vm308 = vcmp.lt.s32.totalorder %v293, 0
        %v309 = vsub.s32 0, %v293
        %v310 = vsel %vm308, %v309, %v293
        %v311 = vshrl.u32 %v310, 4
        %v312 = vand.u32 %v310, 15
        %v313 = vsub.s32 0, %v312
        %v314 = vsel %vm308, %v313, %v312
        %vm315 = vcmp.ne.s32.totalorder %v300, 0
        %vm316 = vcmp.ne.s32.totalorder %v307, 0
        %vm317 = vcmp.ne.s32.totalorder %v314, 0
        %vm318 = vcmp.lt.s32.totalorder %v300, 0
        %vm319 = vcmp.lt.s32.totalorder %v307, 0
        %vm320 = vcmp.lt.s32.totalorder %v314, 0
        %vm321 = vmand %vm318, %vm315
        %vm322 = vmand %vm319, %vm316
        %vm323 = vmand %vm320, %vm317
        %v324 = vadd.s32 %v300, 16
        %v325 = vadd.s32 %v307, 16
        %v326 = vadd.s32 %v314, 16
        %v327 = vsel %vm321, %v324, %v300
        %v328 = vsel %vm322, %v325, %v307
        %v329 = vsel %vm323, %v326, %v314
        %vm330 = vcmp.ne.s32.totalorder %v327, 0
        %vm331 = vcmp.ne.s32.totalorder %v328, 0
        %vm332 = vcmp.ne.s32.totalorder %v329, 0
        %vm333 = vcmp.ne.s32.totalorder %v327, 15
        %vm334 = vcmp.ne.s32.totalorder %v328, 15
        %vm335 = vcmp.ne.s32.totalorder %v329, 15
        %vm336 = vcmp.lt.s32.totalorder %v291, 16
        %vm337 = vcmp.lt.s32.totalorder %v292, 16
        %vm338 = vcmp.lt.s32.totalorder %v293, 16
        %vm339 = vcmp.ge.s32.totalorder %v291, 272
        %vm340 = vcmp.ge.s32.totalorder %v292, 272
        %vm341 = vcmp.ge.s32.totalorder %v293, 272
        %vm342 = vmor %vm336, %vm339
        %vm343 = vmor %vm337, %vm340
        %vm344 = vmor %vm338, %vm341
        %v345 = vld [vmem:[%s289] sm:$0xff]
        %v346 = vld [vmem:[%s289 + $0x8] sm:$0xff]
        %349 = vrot.lane.b32.xlu0 %v345, 16
        %v350 = vpop.permute.xlu0 %349
        %351 = vrot.lane.b32.xlu0 %v346, 16
        %v352 = vpop.permute.xlu0 %351
        %vm353 = vcmask 130048
        %v354 = vsel %vm353, %v350, %v352
        %v357 = vsel %vm353, 0.0, %v350
        %v358 = vsel %vm353, %v352, 0.0
        %361 = vrot.lane.b32.xlu0 %v357, 32
        %v362 = vpop.permute.xlu0 %361
        %363 = vrot.lane.b32.xlu0 %v354, 32
        %v364 = vpop.permute.xlu0 %363
        %365 = vrot.lane.b32.xlu0 %v358, 32
        %v366 = vpop.permute.xlu0 %365
        %vm367 = vcmask 261120
        %v368 = vsel %vm367, %v362, %v364
        %v369 = vsel %vm367, %v364, %v366
        %v372 = vsel %vm367, 0.0, %v362
        %vm373 = vcmask 523264
        %v374 = vsel %vm373, %v369, 0.0
        %v375 = vsel %vm330, 1, 0
        %v376 = vsel %vm331, 1, 0
        %v377 = vsel %vm332, 1, 0
        %vm378 = vcmp.eq.s32.totalorder %v375, 1
        %vm379 = vcmp.eq.s32.totalorder %v376, 1
        %vm380 = vcmp.eq.s32.totalorder %v377, 1
        %383 = vrot.lane.b32.xlu0 %v372, 113
        %v384 = vpop.permute.xlu0 %383
        %385 = vrot.lane.b32.xlu0 %v368, 113
        %v386 = vpop.permute.xlu0 %385
        %387 = vrot.lane.b32.xlu0 %v374, 113
        %v388 = vpop.permute.xlu0 %387
        %vm389 = vcmask 924672
        %v390 = vsel %vm389, %v384, %v386
        %v391 = vsel %vm389, %v386, %v388
        %v395 = vsel %vm378, %v390, 0.0
        %v396 = vsel %vm379, %v391, 0.0
        %v397 = vsel %vm380, %v388, 0.0
        %v398 = vsel %vm333, 1, 0
        %v399 = vsel %vm334, 1, 0
        %v400 = vsel %vm335, 1, 0
        %vm401 = vcmp.eq.s32.totalorder %v398, 1
        %vm402 = vcmp.eq.s32.totalorder %v399, 1
        %vm403 = vcmp.eq.s32.totalorder %v400, 1
        %404 = vrot.lane.b32.xlu0 %v372, 111
        %v405 = vpop.permute.xlu0 %404
        %406 = vrot.lane.b32.xlu0 %v368, 111
        %v407 = vpop.permute.xlu0 %406
        %408 = vrot.lane.b32.xlu0 %v374, 111
        %v409 = vpop.permute.xlu0 %408
        %vm410 = vcmask 908288
        %v411 = vsel %vm410, %v405, %v407
        %v412 = vsel %vm410, %v407, %v409
        %v416 = vsel %vm401, %v411, 0.0
        %v417 = vsel %vm402, %v412, 0.0
        %v418 = vsel %vm403, %v409, 0.0
        %419 = vrot.lane.b32.xlu0 %v372, 97
        %v420 = vpop.permute.xlu0 %419
        %421 = vrot.lane.b32.xlu0 %v368, 97
        %v422 = vpop.permute.xlu0 %421
        %423 = vrot.lane.b32.xlu0 %v374, 97
        %v424 = vpop.permute.xlu0 %423
        %vm425 = vcmask 793600
        %v426 = vsel %vm425, %v420, %v422
        %v427 = vsel %vm425, %v422, %v424
        %v431 = vsel %vm378, %v426, 0.0
        %v432 = vsel %vm379, %v427, 0.0
        %v433 = vsel %vm380, %v424, 0.0
        %434 = vrot.lane.b32.xlu0 %v372, 95
        %v435 = vpop.permute.xlu0 %434
        %436 = vrot.lane.b32.xlu0 %v368, 95
        %v437 = vpop.permute.xlu0 %436
        %438 = vrot.lane.b32.xlu0 %v374, 95
        %v439 = vpop.permute.xlu0 %438
        %vm440 = vcmask 777216
        %v441 = vsel %vm440, %v435, %v437
        %v442 = vsel %vm440, %v437, %v439
        %v446 = vsel %vm401, %v441, 0.0
        %v447 = vsel %vm402, %v442, 0.0
        %v448 = vsel %vm403, %v439, 0.0
        %449 = vrot.lane.b32.xlu0 %v372, 81
        %v450 = vpop.permute.xlu0 %449
        %451 = vrot.lane.b32.xlu0 %v368, 81
        %v452 = vpop.permute.xlu0 %451
        %453 = vrot.lane.b32.xlu0 %v374, 81
        %v454 = vpop.permute.xlu0 %453
        %vm455 = vcmask 662528
        %v456 = vsel %vm455, %v450, %v452
        %v457 = vsel %vm455, %v452, %v454
        %v461 = vsel %vm378, %v456, 0.0
        %v462 = vsel %vm379, %v457, 0.0
        %v463 = vsel %vm380, %v454, 0.0
        %464 = vrot.lane.b32.xlu0 %v372, 79
        %v465 = vpop.permute.xlu0 %464
        %466 = vrot.lane.b32.xlu0 %v368, 79
        %v467 = vpop.permute.xlu0 %466
        %468 = vrot.lane.b32.xlu0 %v374, 79
        %v469 = vpop.permute.xlu0 %468
        %vm470 = vcmask 646144
        %v471 = vsel %vm470, %v465, %v467
        %v472 = vsel %vm470, %v467, %v469
        %v476 = vsel %vm401, %v471, 0.0
        %v477 = vsel %vm402, %v472, 0.0
        %v478 = vsel %vm403, %v469, 0.0
        %479 = vrot.lane.b32.xlu0 %v372, 112
        %v480 = vpop.permute.xlu0 %479
        %481 = vrot.lane.b32.xlu0 %v368, 112
        %v482 = vpop.permute.xlu0 %481
        %483 = vrot.lane.b32.xlu0 %v374, 112
        %v484 = vpop.permute.xlu0 %483
        %vm485 = vcmask 916480
        %v486 = vsel %vm485, %v480, %v482
        %v487 = vsel %vm485, %v482, %v484
        %491 = vrot.lane.b32.xlu0 %v372, 96
        %v492 = vpop.permute.xlu0 %491
        %493 = vrot.lane.b32.xlu0 %v368, 96
        %v494 = vpop.permute.xlu0 %493
        %495 = vrot.lane.b32.xlu0 %v374, 96
        %v496 = vpop.permute.xlu0 %495
        %vm497 = vcmask 785408
        %v498 = vsel %vm497, %v492, %v494
        %v499 = vsel %vm497, %v494, %v496
        %503 = vrot.lane.b32.xlu0 %v372, 80
        %v504 = vpop.permute.xlu0 %503
        %505 = vrot.lane.b32.xlu0 %v368, 80
        %v506 = vpop.permute.xlu0 %505
        %507 = vrot.lane.b32.xlu0 %v374, 80
        %v508 = vpop.permute.xlu0 %507
        %vm509 = vcmask 654336
        %v510 = vsel %vm509, %v504, %v506
        %v511 = vsel %vm509, %v506, %v508
        %v515 = vld [vmem:[#allocation2] sm:$0xff]
        %vm516 = vcmask 588800
        %v518 = vsel %vm516, %v515, 0
        %520 = vmatprep.subr.mxu0 %v396
        %521 = vmatpush1.msra.mxu0 %v395
        %522 = vmatprep.subr.mxu0 %v487
        %523 = vmatpush1.msra.mxu0 %v486
        %524 = vmatprep.subr.mxu0 %v417
        %525 = vmatpush1.msra.mxu0 %v416
        %526 = vmatprep.subr.mxu0 %v432
        %527 = vmatpush1.msra.mxu0 %v431
        %528 = vmatprep.subr.mxu0 %v499
        %529 = vmatpush1.msra.mxu0 %v498
        %530 = vmatprep.subr.mxu0 %v447
        %531 = vmatpush1.msra.mxu0 %v446
        %532 = vmatprep.subr.mxu0 %v462
        %533 = vmatpush1.msra.mxu0 %v461
        %534 = vmatprep.subr.mxu0 %v511
        %535 = vmatpush1.msra.mxu0 %v510
        %536 = vmatprep.subr.mxu0 %v477
        %537 = vmatpush1.msra.mxu0 %v476
        %538 = vmatprep.subr.mxu0 0.0
        %539 = vmatpush1.msra.mxu0 0.0
        %540 = vmatprep.subr.mxu0 0.0
        %541 = vmatpush1.msra.mxu0 0.0
        %542 = vmatprep.subr.mxu0 0.0
        %543 = vmatpush1.msra.mxu0 0.0
        %544 = vmatprep.subr.mxu0 0.0
        %545 = vmatpush1.msra.mxu0 0.0
        %546 = vmatprep.subr.mxu0 0.0
        %547 = vmatpush1.msra.mxu0 0.0
        %548 = vmatprep.subr.mxu0 0.0
        %549 = vmatpush1.msra.mxu0 0.0
        %550 = vmatprep.subr.mxu0 0.0
        %551 = vmatpush1.msra.mxu0 0.0
        %552 = vmatprep.subr.mxu0 0.0
        %553 = vmatpush1.msra.mxu0 0.0
        %554 = vmatprep.subr.mxu0 0.0
        %555 = vmatpush1.msra.mxu0 0.0
        %556 = vmatprep.subr.mxu0 0.0
        %557 = vmatpush1.msra.mxu0 0.0
        %558 = vmatprep.subr.mxu0 0.0
        %559 = vmatpush1.msra.mxu0 0.0
        %560 = vmatprep.subr.mxu0 0.0
        %561 = vmatpush1.msra.mxu0 0.0
        %562 = vmatprep.subr.mxu0 0.0
        %563 = vmatpush1.msra.mxu0 0.0
        %564 = vmatprep.subr.mxu0 0.0
        %565 = vmatpush1.msra.mxu0 0.0
        %566 = vmatprep.subr.mxu0 0.0
        %567 = vmatpush1.msra.mxu0 0.0
        %568 = vmatprep.subr.mxu0 0.0
        %569 = vmatpush1.msra.mxu0 0.0
        %570 = vmatprep.subr.mxu0 0.0
        %571 = vmatpush1.msra.mxu0 0.0
        %572 = vmatprep.subr.mxu0 0.0
        %573 = vmatpush1.msra.mxu0 0.0
        %574 = vmatprep.subr.mxu0 0.0
        %575 = vmatpush1.msra.mxu0 0.0
        %576 = vmatprep.subr.mxu0 0.0
        %577 = vmatpush1.msra.mxu0 0.0
        %578 = vmatprep.subr.mxu0 0.0
        %579 = vmatpush1.msra.mxu0 0.0
        %580 = vmatprep.subr.mxu0 0.0
        %581 = vmatpush1.msra.mxu0 0.0
        %582 = vmatprep.subr.mxu0 0.0
        %583 = vmatpush1.msra.mxu0 0.0
        %584 = vmatprep.mubr.f32.mxu0 0.0
        %585 = vmatmul.mubr.f32.gmra.mrb[0].mxu0 %v518
        %v586 = vpop.f32.mrb[0].mxu0
        %v587 = vadd.f32 0.0, %v586
        %v588 = vpop.f32.mrb[0].mxu0
        %v589 = vadd.f32 0.0, %v588
        %590 = vdwg.mxu0
        %591 = vmatprep.subr.mxu0 0.0
        %592 = vmatpush1.msra.mxu0 %v397
        %593 = vmatprep.subr.mxu0 0.0
        %594 = vmatpush1.msra.mxu0 %v484
        %595 = vmatprep.subr.mxu0 0.0
        %596 = vmatpush1.msra.mxu0 %v418
        %597 = vmatprep.subr.mxu0 0.0
        %598 = vmatpush1.msra.mxu0 %v433
        %599 = vmatprep.subr.mxu0 0.0
        %600 = vmatpush1.msra.mxu0 %v496
        %601 = vmatprep.subr.mxu0 0.0
        %602 = vmatpush1.msra.mxu0 %v448
        %603 = vmatprep.subr.mxu0 0.0
        %604 = vmatpush1.msra.mxu0 %v463
        %605 = vmatprep.subr.mxu0 0.0
        %606 = vmatpush1.msra.mxu0 %v508
        %607 = vmatprep.subr.mxu0 0.0
        %608 = vmatpush1.msra.mxu0 %v478
        %609 = vmatprep.subr.mxu0 0.0
        %610 = vmatpush1.msra.mxu0 0.0
        %611 = vmatprep.subr.mxu0 0.0
        %612 = vmatpush1.msra.mxu0 0.0
        %613 = vmatprep.subr.mxu0 0.0
        %614 = vmatpush1.msra.mxu0 0.0
        %615 = vmatprep.subr.mxu0 0.0
        %616 = vmatpush1.msra.mxu0 0.0
        %617 = vmatprep.subr.mxu0 0.0
        %618 = vmatpush1.msra.mxu0 0.0
        %619 = vmatprep.subr.mxu0 0.0
        %620 = vmatpush1.msra.mxu0 0.0
        %621 = vmatprep.subr.mxu0 0.0
        %622 = vmatpush1.msra.mxu0 0.0
        %623 = vmatprep.subr.mxu0 0.0
        %624 = vmatpush1.msra.mxu0 0.0
        %625 = vmatprep.subr.mxu0 0.0
        %626 = vmatpush1.msra.mxu0 0.0
        %627 = vmatprep.subr.mxu0 0.0
        %628 = vmatpush1.msra.mxu0 0.0
        %629 = vmatprep.subr.mxu0 0.0
        %630 = vmatpush1.msra.mxu0 0.0
        %631 = vmatprep.subr.mxu0 0.0
        %632 = vmatpush1.msra.mxu0 0.0
        %633 = vmatprep.subr.mxu0 0.0
        %634 = vmatpush1.msra.mxu0 0.0
        %635 = vmatprep.subr.mxu0 0.0
        %636 = vmatpush1.msra.mxu0 0.0
        %637 = vmatprep.subr.mxu0 0.0
        %638 = vmatpush1.msra.mxu0 0.0
        %639 = vmatprep.subr.mxu0 0.0
        %640 = vmatpush1.msra.mxu0 0.0
        %641 = vmatprep.subr.mxu0 0.0
        %642 = vmatpush1.msra.mxu0 0.0
        %643 = vmatprep.subr.mxu0 0.0
        %644 = vmatpush1.msra.mxu0 0.0
        %645 = vmatprep.subr.mxu0 0.0
        %646 = vmatpush1.msra.mxu0 0.0
        %647 = vmatprep.subr.mxu0 0.0
        %648 = vmatpush1.msra.mxu0 0.0
        %649 = vmatprep.subr.mxu0 0.0
        %650 = vmatpush1.msra.mxu0 0.0
        %651 = vmatprep.subr.mxu0 0.0
        %652 = vmatpush1.msra.mxu0 0.0
        %653 = vmatprep.subr.mxu0 0.0
        %654 = vmatpush1.msra.mxu0 0.0
        %655 = vmatprep.mubr.f32.mxu0 0.0
        %656 = vmatmul.mubr.f32.gmra.mrb[0].mxu0 %v518
        %v657 = vpop.f32.mrb[0].mxu0
        %v658 = vadd.f32 0.0, %v657
        %v659 = vpop.f32.mrb[0].mxu0
        %660 = vdwg.mxu0
        %v661 = vld [vmem:[%s2] sm:$0xff]
        %663 = vset.pattern.permute.xlu0 0
        %664 = vperm.xlu0 %663, %v661
        %v665 = vpop.permute.xlu0 %664
        %v667 = vmul.f32 %v587, %v665
        %v668 = vmul.f32 %v589, %v665
        %v669 = vmul.f32 %v658, %v665
        %v670 = vld [vmem:[%s3] sm:$0xff]
        %672 = vset.pattern.permute.xlu0 0
        %673 = vperm.xlu0 %672, %v670
        %v674 = vpop.permute.xlu0 %673
        %v676 = vadd.f32 %v667, %v674
        %v677 = vadd.f32 %v668, %v674
        %v678 = vadd.f32 %v669, %v674
        %v679 = vmax.f32 %v676, 0.0
        %v680 = vmax.f32 %v677, 0.0
        %v681 = vmax.f32 %v678, 0.0
        %v682 = vsel %vm342, 1, 0
        %v683 = vsel %vm343, 1, 0
        %v684 = vsel %vm344, 1, 0
        %vm685 = vcmp.eq.s32.totalorder %v682, 1
        %vm686 = vcmp.eq.s32.totalorder %v683, 1
        %vm687 = vcmp.eq.s32.totalorder %v684, 1
        %v688 = vsel %vm685, 0.0, %v679
        %v689 = vsel %vm686, 0.0, %v680
        %v690 = vsel %vm687, 0.0, %v681
        %694 = vrot.lane.b32.xlu0 %v688, 32
        %v695 = vpop.permute.xlu0 %694
        %696 = vrot.lane.b32.xlu0 %v689, 32
        %v697 = vpop.permute.xlu0 %696
        %698 = vrot.lane.b32.xlu0 %v690, 32
        %v699 = vpop.permute.xlu0 %698
        %v700 = vsel %vm367, %v695, %v697
        %v701 = vsel %vm367, %v697, %v699
        %v704 = vsel %vm367, 0.0, %v695
        %v705 = vsel %vm373, %v701, 0.0
        %708 = vrot.lane.b32.xlu0 %v704, 113
        %v709 = vpop.permute.xlu0 %708
        %710 = vrot.lane.b32.xlu0 %v700, 113
        %v711 = vpop.permute.xlu0 %710
        %712 = vrot.lane.b32.xlu0 %v705, 113
        %v713 = vpop.permute.xlu0 %712
        %v714 = vsel %vm389, %v709, %v711
        %v715 = vsel %vm389, %v711, %v713
        %v719 = vsel %vm378, %v714, 0.0
        %v720 = vsel %vm379, %v715, 0.0
        %v721 = vsel %vm380, %v713, 0.0
        %722 = vrot.lane.b32.xlu0 %v704, 111
        %v723 = vpop.permute.xlu0 %722
        %724 = vrot.lane.b32.xlu0 %v700, 111
        %v725 = vpop.permute.xlu0 %724
        %726 = vrot.lane.b32.xlu0 %v705, 111
        %v727 = vpop.permute.xlu0 %726
        %v728 = vsel %vm410, %v723, %v725
        %v729 = vsel %vm410, %v725, %v727
        %v733 = vsel %vm401, %v728, 0.0
        %v734 = vsel %vm402, %v729, 0.0
        %v735 = vsel %vm403, %v727, 0.0
        %736 = vrot.lane.b32.xlu0 %v704, 97
        %v737 = vpop.permute.xlu0 %736
        %738 = vrot.lane.b32.xlu0 %v700, 97
        %v739 = vpop.permute.xlu0 %738
        %740 = vrot.lane.b32.xlu0 %v705, 97
        %v741 = vpop.permute.xlu0 %740
        %v742 = vsel %vm425, %v737, %v739
        %v743 = vsel %vm425, %v739, %v741
        %v747 = vsel %vm378, %v742, 0.0
        %v748 = vsel %vm379, %v743, 0.0
        %v749 = vsel %vm380, %v741, 0.0
        %750 = vrot.lane.b32.xlu0 %v704, 95
        %v751 = vpop.permute.xlu0 %750
        %752 = vrot.lane.b32.xlu0 %v700, 95
        %v753 = vpop.permute.xlu0 %752
        %754 = vrot.lane.b32.xlu0 %v705, 95
        %v755 = vpop.permute.xlu0 %754
        %v756 = vsel %vm440, %v751, %v753
        %v757 = vsel %vm440, %v753, %v755
        %v761 = vsel %vm401, %v756, 0.0
        %v762 = vsel %vm402, %v757, 0.0
        %v763 = vsel %vm403, %v755, 0.0
        %764 = vrot.lane.b32.xlu0 %v704, 81
        %v765 = vpop.permute.xlu0 %764
        %766 = vrot.lane.b32.xlu0 %v700, 81
        %v767 = vpop.permute.xlu0 %766
        %768 = vrot.lane.b32.xlu0 %v705, 81
        %v769 = vpop.permute.xlu0 %768
        %v770 = vsel %vm455, %v765, %v767
        %v771 = vsel %vm455, %v767, %v769
        %v775 = vsel %vm378, %v770, 0.0
        %v776 = vsel %vm379, %v771, 0.0
        %v777 = vsel %vm380, %v769, 0.0
        %778 = vrot.lane.b32.xlu0 %v704, 79
        %v779 = vpop.permute.xlu0 %778
        %780 = vrot.lane.b32.xlu0 %v700, 79
        %v781 = vpop.permute.xlu0 %780
        %782 = vrot.lane.b32.xlu0 %v705, 79
        %v783 = vpop.permute.xlu0 %782
        %v784 = vsel %vm470, %v779, %v781
        %v785 = vsel %vm470, %v781, %v783
        %v789 = vsel %vm401, %v784, 0.0
        %v790 = vsel %vm402, %v785, 0.0
        %v791 = vsel %vm403, %v783, 0.0
        %792 = vrot.lane.b32.xlu0 %v704, 112
        %v793 = vpop.permute.xlu0 %792
        %794 = vrot.lane.b32.xlu0 %v700, 112
        %v795 = vpop.permute.xlu0 %794
        %796 = vrot.lane.b32.xlu0 %v705, 112
        %v797 = vpop.permute.xlu0 %796
        %v798 = vsel %vm485, %v793, %v795
        %v799 = vsel %vm485, %v795, %v797
        %803 = vrot.lane.b32.xlu0 %v704, 96
        %v804 = vpop.permute.xlu0 %803
        %805 = vrot.lane.b32.xlu0 %v700, 96
        %v806 = vpop.permute.xlu0 %805
        %807 = vrot.lane.b32.xlu0 %v705, 96
        %v808 = vpop.permute.xlu0 %807
        %v809 = vsel %vm497, %v804, %v806
        %v810 = vsel %vm497, %v806, %v808
        %814 = vrot.lane.b32.xlu0 %v704, 80
        %v815 = vpop.permute.xlu0 %814
        %816 = vrot.lane.b32.xlu0 %v700, 80
        %v817 = vpop.permute.xlu0 %816
        %818 = vrot.lane.b32.xlu0 %v705, 80
        %v819 = vpop.permute.xlu0 %818
        %v820 = vsel %vm509, %v815, %v817
        %v821 = vsel %vm509, %v817, %v819
        %v825 = vld [vmem:[%s4] sm:$0xff]
        %v827 = vsel %vm516, %v825, 0
        %829 = vmatprep.subr.mxu0 %v720
        %830 = vmatpush1.msra.mxu0 %v719
        %831 = vmatprep.subr.mxu0 %v799
        %832 = vmatpush1.msra.mxu0 %v798
        %833 = vmatprep.subr.mxu0 %v734
        %834 = vmatpush1.msra.mxu0 %v733
        %835 = vmatprep.subr.mxu0 %v748
        %836 = vmatpush1.msra.mxu0 %v747
        %837 = vmatprep.subr.mxu0 %v810
        %838 = vmatpush1.msra.mxu0 %v809
        %839 = vmatprep.subr.mxu0 %v762
        %840 = vmatpush1.msra.mxu0 %v761
        %841 = vmatprep.subr.mxu0 %v776
        %842 = vmatpush1.msra.mxu0 %v775
        %843 = vmatprep.subr.mxu0 %v821
        %844 = vmatpush1.msra.mxu0 %v820
        %845 = vmatprep.subr.mxu0 %v790
        %846 = vmatpush1.msra.mxu0 %v789
        %847 = vmatprep.subr.mxu0 0.0
        %848 = vmatpush1.msra.mxu0 0.0
        %849 = vmatprep.subr.mxu0 0.0
        %850 = vmatpush1.msra.mxu0 0.0
        %851 = vmatprep.subr.mxu0 0.0
        %852 = vmatpush1.msra.mxu0 0.0
        %853 = vmatprep.subr.mxu0 0.0
        %854 = vmatpush1.msra.mxu0 0.0
        %855 = vmatprep.subr.mxu0 0.0
        %856 = vmatpush1.msra.mxu0 0.0
        %857 = vmatprep.subr.mxu0 0.0
        %858 = vmatpush1.msra.mxu0 0.0
        %859 = vmatprep.subr.mxu0 0.0
        %860 = vmatpush1.msra.mxu0 0.0
        %861 = vmatprep.subr.mxu0 0.0
        %862 = vmatpush1.msra.mxu0 0.0
        %863 = vmatprep.subr.mxu0 0.0
        %864 = vmatpush1.msra.mxu0 0.0
        %865 = vmatprep.subr.mxu0 0.0
        %866 = vmatpush1.msra.mxu0 0.0
        %867 = vmatprep.subr.mxu0 0.0
        %868 = vmatpush1.msra.mxu0 0.0
        %869 = vmatprep.subr.mxu0 0.0
        %870 = vmatpush1.msra.mxu0 0.0
        %871 = vmatprep.subr.mxu0 0.0
        %872 = vmatpush1.msra.mxu0 0.0
        %873 = vmatprep.subr.mxu0 0.0
        %874 = vmatpush1.msra.mxu0 0.0
        %875 = vmatprep.subr.mxu0 0.0
        %876 = vmatpush1.msra.mxu0 0.0
        %877 = vmatprep.subr.mxu0 0.0
        %878 = vmatpush1.msra.mxu0 0.0
        %879 = vmatprep.subr.mxu0 0.0
        %880 = vmatpush1.msra.mxu0 0.0
        %881 = vmatprep.subr.mxu0 0.0
        %882 = vmatpush1.msra.mxu0 0.0
        %883 = vmatprep.subr.mxu0 0.0
        %884 = vmatpush1.msra.mxu0 0.0
        %885 = vmatprep.subr.mxu0 0.0
        %886 = vmatpush1.msra.mxu0 0.0
        %887 = vmatprep.subr.mxu0 0.0
        %888 = vmatpush1.msra.mxu0 0.0
        %889 = vmatprep.subr.mxu0 0.0
        %890 = vmatpush1.msra.mxu0 0.0
        %891 = vmatprep.subr.mxu0 0.0
        %892 = vmatpush1.msra.mxu0 0.0
        %893 = vmatprep.mubr.f32.mxu0 0.0
        %894 = vmatmul.mubr.f32.gmra.mrb[0].mxu0 %v827
        %v895 = vpop.f32.mrb[0].mxu0
        %v896 = vadd.f32 0.0, %v895
        %v897 = vpop.f32.mrb[0].mxu0
        %v898 = vadd.f32 0.0, %v897
        %899 = vdwg.mxu0
        %900 = vmatprep.subr.mxu0 0.0
        %901 = vmatpush1.msra.mxu0 %v721
        %902 = vmatprep.subr.mxu0 0.0
        %903 = vmatpush1.msra.mxu0 %v797
        %904 = vmatprep.subr.mxu0 0.0
        %905 = vmatpush1.msra.mxu0 %v735
        %906 = vmatprep.subr.mxu0 0.0
        %907 = vmatpush1.msra.mxu0 %v749
        %908 = vmatprep.subr.mxu0 0.0
        %909 = vmatpush1.msra.mxu0 %v808
        %910 = vmatprep.subr.mxu0 0.0
        %911 = vmatpush1.msra.mxu0 %v763
        %912 = vmatprep.subr.mxu0 0.0
        %913 = vmatpush1.msra.mxu0 %v777
        %914 = vmatprep.subr.mxu0 0.0
        %915 = vmatpush1.msra.mxu0 %v819
        %916 = vmatprep.subr.mxu0 0.0
        %917 = vmatpush1.msra.mxu0 %v791
        %918 = vmatprep.subr.mxu0 0.0
        %919 = vmatpush1.msra.mxu0 0.0
        %920 = vmatprep.subr.mxu0 0.0
        %921 = vmatpush1.msra.mxu0 0.0
        %922 = vmatprep.subr.mxu0 0.0
        %923 = vmatpush1.msra.mxu0 0.0
        %924 = vmatprep.subr.mxu0 0.0
        %925 = vmatpush1.msra.mxu0 0.0
        %926 = vmatprep.subr.mxu0 0.0
        %927 = vmatpush1.msra.mxu0 0.0
        %928 = vmatprep.subr.mxu0 0.0
        %929 = vmatpush1.msra.mxu0 0.0
        %930 = vmatprep.subr.mxu0 0.0
        %931 = vmatpush1.msra.mxu0 0.0
        %932 = vmatprep.subr.mxu0 0.0
        %933 = vmatpush1.msra.mxu0 0.0
        %934 = vmatprep.subr.mxu0 0.0
        %935 = vmatpush1.msra.mxu0 0.0
        %936 = vmatprep.subr.mxu0 0.0
        %937 = vmatpush1.msra.mxu0 0.0
        %938 = vmatprep.subr.mxu0 0.0
        %939 = vmatpush1.msra.mxu0 0.0
        %940 = vmatprep.subr.mxu0 0.0
        %941 = vmatpush1.msra.mxu0 0.0
        %942 = vmatprep.subr.mxu0 0.0
        %943 = vmatpush1.msra.mxu0 0.0
        %944 = vmatprep.subr.mxu0 0.0
        %945 = vmatpush1.msra.mxu0 0.0
        %946 = vmatprep.subr.mxu0 0.0
        %947 = vmatpush1.msra.mxu0 0.0
        %948 = vmatprep.subr.mxu0 0.0
        %949 = vmatpush1.msra.mxu0 0.0
        %950 = vmatprep.subr.mxu0 0.0
        %951 = vmatpush1.msra.mxu0 0.0
        %952 = vmatprep.subr.mxu0 0.0
        %953 = vmatpush1.msra.mxu0 0.0
        %954 = vmatprep.subr.mxu0 0.0
        %955 = vmatpush1.msra.mxu0 0.0
        %956 = vmatprep.subr.mxu0 0.0
        %957 = vmatpush1.msra.mxu0 0.0
        %958 = vmatprep.subr.mxu0 0.0
        %959 = vmatpush1.msra.mxu0 0.0
        %960 = vmatprep.subr.mxu0 0.0
        %961 = vmatpush1.msra.mxu0 0.0
        %962 = vmatprep.subr.mxu0 0.0
        %963 = vmatpush1.msra.mxu0 0.0
        %964 = vmatprep.mubr.f32.mxu0 0.0
        %965 = vmatmul.mubr.f32.gmra.mrb[0].mxu0 %v827
        %v966 = vpop.f32.mrb[0].mxu0
        %v967 = vadd.f32 0.0, %v966
        %v968 = vpop.f32.mrb[0].mxu0
        %969 = vdwg.mxu0
        %v970 = vld [vmem:[%s5] sm:$0xff]
        %972 = vset.pattern.permute.xlu0 0
        %973 = vperm.xlu0 %972, %v970
        %v974 = vpop.permute.xlu0 %973
        %v976 = vmul.f32 %v896, %v974
        %v977 = vmul.f32 %v898, %v974
        %v978 = vmul.f32 %v967, %v974
        %v979 = vld [vmem:[%s6] sm:$0xff]
        %981 = vset.pattern.permute.xlu0 0
        %982 = vperm.xlu0 %981, %v979
        %v983 = vpop.permute.xlu0 %982
        %v985 = vadd.f32 %v976, %v983
        %v986 = vadd.f32 %v977, %v983
        %v987 = vadd.f32 %v978, %v983
        %v989 = vadd.f32 %v985, %v350
        %v990 = vadd.f32 %v986, %v354
        %v991 = vadd.f32 %v987, %v352
        %v992 = vmax.f32 %v989, 0.0
        %v993 = vmax.f32 %v990, 0.0
        %v994 = vmax.f32 %v991, 0.0
        %998 = vrot.lane.b32.xlu0 %v992, 112
        %v999 = vpop.permute.xlu0 %998
        %1000 = vrot.lane.b32.xlu0 %v993, 112
        %v1001 = vpop.permute.xlu0 %1000
        %1002 = vrot.lane.b32.xlu0 %v994, 112
        %v1003 = vpop.permute.xlu0 %1002
        %v1004 = vsel %vm485, %v999, %v1001
        %v1005 = vsel %vm485, %v1001, %v1003
        %1008 = vst [vmem:[%s284] sm:$0xff] %v1004
        %1009 = vst [vmem:[%s284 + $0x8] sm:$0xff] %v1005
        %s1010 = sand.u32 %s182, 1
        %s1011 = scalar_lea.sflag [#allocation4], %s1010
        %s1012 = sand.u32 %s182, 1
        %s1013 = smul.addr %s1012, 16
        %s1014 = scalar_lea.vmem [#allocation5], %s1013
        // Predicated region
        $region53: #{tpu_custom_call.1} parent=47 // pred_check
          %p1015 = pneg %p192
        $region54: #{tpu_custom_call.1} parent=47 // pred_check_branch
          %1017 = sbr.rel (%p1015) target = $region56
        $region55: #{tpu_custom_call.1} parent=47 // pred_region
          %s1019 = ssub.s32 256, 256
          %1020 = vsyncadd %s1011, %s1019
          %s1021 = smul.addr %s22, 2
          %s1022 = smul.addr %s1021, 128
          %s1023 = scalar_lea.hbm %s7, %s1022
          %s1025 = sshll.u32 %s1014, 4
          %s1026 = int_to_ptr.vmem [resolvable:$true] %s1025
          %1028 = dma.vmem_to_hbm [thread:$0]  %s1026, 256, %s1023, %s1011
        $region56: #{tpu_custom_call.1} parent=47 // pred_fallthru
          _
      $region48: #{tpu_custom_call.1} parent=5 // pred_fallthru
        _
      %p1029 = scmp.le.s32.totalorder 2, %s17
      // Predicated region
      $region57: #{tpu_custom_call.1} parent=5 // pred_check
        %p1030 = pneg %p1029
      $region58: #{tpu_custom_call.1} parent=5 // pred_check_branch
        %1032 = sbr.rel (%p1030) target = $region60
      $region59: #{tpu_custom_call.1} parent=5 // pred_region
        %s1033 = ssub.s32 %s17, 2
        // Predicated region
        $region61: #{tpu_custom_call.1} parent=59 // pred_check
          %p1034 = pneg %p198
        $region62: #{tpu_custom_call.1} parent=59 // pred_check_branch
          %1036 = sbr.rel (%p1034) target = $region64
        $region63: #{tpu_custom_call.1} parent=59 // pred_region
          %s1037 = sand.u32 %s183, 1
          %s1038 = scalar_lea.sflag [#allocation4], %s1037
          %s1039 = sand.u32 %s183, 1
          %s1040 = smul.addr %s1039, 16
          %s1041 = scalar_lea.vmem [#allocation5], %s1040
          %1042 = dma.done %s1038, 256
        $region64: #{tpu_custom_call.1} parent=59 // pred_fallthru
          _
      $region60: #{tpu_custom_call.1} parent=5 // pred_fallthru
        _
    $region6: #{tpu_custom_call.1} parent=1 // loop_footer
      %s21 = sadd.s32 1, %s17
    $region7: #{tpu_custom_call.1} parent=1 // loop_footer_branch
      %16 = sbr.rel target = $region3
    $region8: #{tpu_custom_call.1} parent=1 // loop_exit
      _
    %1043 = vsyncpa [#allocation3], 1
    %s1044 = scalar_lea.sflag [#allocation3], 1
    %1045 = vsyncpa %s1044, 1
    %1046 = vsyncpa [#allocation4], 1
    %s1047 = scalar_lea.sflag [#allocation4], 1
    %1048 = vsyncpa %s1047, 1

</llo_original>
